<compile_context>
chip_gen: v5e
topology: v5e:2x2
jax: 0.10.0
libtpu: 0.0.40
codegen_flags: <defaults>
</compile_context>

<pallas_src>
import jax
import jax.numpy as jnp
import numpy as np
from jax.experimental import pallas as pl
from jax.experimental.pallas import tpu as pltpu


def _num_tensorcores() -> int:
    """Best-effort TensorCores-per-chip (1 on v5e/v6e, 2 on v4/v5p/v7x)."""
    try:
        info = pltpu.get_tpu_info()
        for name in ("num_tensorcores", "tensorcore_count", "num_cores",
                     "cores_per_chip"):
            n = getattr(info, name, None)
            if isinstance(n, (int, np.integer)) and int(n) >= 1:
                return int(n)
    except Exception:
        pass
    try:
        kind = jax.devices()[0].device_kind.lower()
        if ("v4" in kind) or ("v5p" in kind) or ("7" in kind):
            return 2
    except Exception:
        pass
    return 1


def make_encoder(B, L, V, E, F, K, KP, num_tensorcores=None):
    C = L                       # Conv1d in_channels (lazily inferred = seq len)
    T = E - K + 1               # conv output length (stride 1, VALID)
    P = T // KP                 # MaxPool1d(KP, stride=KP), floor mode
    CK = C * K
    assert P >= 1
    # Wrap-around junk from the im2col / pooling lane rolls only ever lands in
    # lanes >= T (conv-invalid tail) or past a per-batch block boundary; kept
    # pool windows only read lanes < P*KP <= T <= E, so no junk reaches the
    # output. Keep this assert so future pooling-mode changes don't silently
    # read garbage.
    assert P * KP <= T <= E

    if num_tensorcores is None:
        num_tensorcores = _num_tensorcores()
    # Single grid step on single-TC chips (grid steps cost ~0.35 us each and
    # shrink the fused matmul); two "parallel" steps on multi-TC chips.
    G = 2 if (num_tensorcores >= 2 and B >= 2 and B % 2 == 0) else 1
    BB = B // G                 # batches per grid step
    BBE = BB * E
    BBP = BB * P

    # Pool-compaction selector: picks acc lane bb*E + p*KP into output column
    # bb*P + p (cropping the invalid tail pool column in-kernel).
    sel_np = np.zeros((BBE, BBP), np.float32)
    for bb in range(BB):
        for p in range(P):
            sel_np[bb * E + p * KP, bb * P + p] = 1.0
    sel = jnp.asarray(sel_np)

    # Constant-index operands never change block; double-buffering them is pure
    # VMEM waste once V grows. Switch to single-buffering past a soft budget.
    const_dbuf_bytes = 2 * 4 * (V * E + F * CK + F + BBE * BBP)
    single_buffer_consts = const_dbuf_bytes > (8 << 20)
    # TODO(synk): for vocabularies where even a single-buffered table overflows
    # scoped VMEM (first on v7x / v5e), move the table to memory_space=pl.ANY
    # and DMA-gather embedding rows using scalar-prefetched token ids instead
    # of the one-hot matmul.

    def const_spec(shape):
        idx = lambda g, _n=len(shape): (0,) * _n
        if single_buffer_consts:
            return pl.BlockSpec(shape, idx, pipeline_mode=pl.Buffered(1))
        return pl.BlockSpec(shape, idx)

    def kernel(tok_ref, table_ref, w_ref, b_ref, sel_ref, o_ref):
        # --- Embedding gather: ONE one-hot MXU matmul for all BB*C rows ------
        toks = tok_ref[...].reshape(BB * C, 1)                       # int32
        onehot = (jax.lax.broadcasted_iota(jnp.int32, (BB * C, V), 1)
                  == toks).astype(jnp.float32)                       # (BB*C, V)
        xall = jnp.dot(onehot, table_ref[...],
                       preferred_element_type=jnp.float32)           # (BB*C, E)

        # --- im2col via K-1 full-tile lane rolls (XLU slot, whole vregs) -----
        rolled = [xall] + [pltpu.roll(xall, shift=E - k, axis=1)
                           for k in range(1, K)]
        if BB == 1:
            X = jnp.concatenate(rolled, axis=0)                      # (C*K, E)
        else:
            cols = [jnp.concatenate([r[bb * C:(bb + 1) * C, :] for r in rolled],
                                    axis=0)
                    for bb in range(BB)]                             # (C*K, E) each
            X = jnp.concatenate(cols, axis=1)                        # (C*K, BB*E)

        # --- Conv1d as ONE fused im2col matmul (bias deferred to post-pool) --
        acc = jnp.dot(w_ref[...], X,
                      preferred_element_type=jnp.float32)            # (F, BB*E)

        # --- MaxPool1d: max of KP lane-rolled copies (VPU max on whole vregs,
        #     no lanes->sublanes reshape) ---------------------------------
        pooled = acc
        for j in range(1, KP):
            pooled = jnp.maximum(pooled, pltpu.roll(acc, shift=BBE - j, axis=1))

        # --- Lane compaction + tail crop on the idle MXU; bias post-pool -----
        out = jnp.dot(pooled, sel_ref[...],
                      preferred_element_type=jnp.float32)            # (F, BB*P)
        o_ref[0] = out + b_ref[...]

    grid_spec = pltpu.PrefetchScalarGridSpec(
        num_scalar_prefetch=0,
        grid=(G,),
        in_specs=[
            pl.BlockSpec((BB, L, 1), lambda g: (g, 0, 0)),  # tokens (per step)
            const_spec((V, E)),                             # embedding table
            const_spec((F, CK)),                            # fused conv weight
            const_spec((F, 1)),                             # conv bias
            const_spec((BBE, BBP)),                         # pool selector
        ],
        out_specs=pl.BlockSpec((1, F, BBP), lambda g: (g, 0, 0)),
    )

    call = pl.pallas_call(
        kernel,
        out_shape=jax.ShapeDtypeStruct((G, F, BBP), jnp.float32),
        grid_spec=grid_spec,
        compiler_params=pltpu.CompilerParams(
            dimension_semantics=("parallel",)),   # batch axis carries no state
    )

    def prepare_params(table, w, bias):
        """One-time parameter re-layout (hoisted out of the per-call path)."""
        w2d = jnp.transpose(w, (0, 2, 1)).reshape(F, CK).astype(jnp.float32)
        b2d = bias.reshape(F, 1).astype(jnp.float32)
        return table.astype(jnp.float32), w2d, b2d

    @jax.jit
    def encoder(tokens, table_f32, w2d, b2d):
        tok3 = tokens.astype(jnp.int32).reshape(B, L, 1)
        out = call(tok3, table_f32, w2d, b2d, sel)          # (G, F, BB*P)
        # un-interleave (g, bb) -> batch, then nn.Flatten(start_dim=1)
        return out.reshape(G, F, BB, P).transpose(0, 2, 1, 3).reshape(B, F * P)

    return prepare_params, encoder


def ref_encoder(tokens, table, w, bias, KP):
    """Pure-JAX reference matching the PyTorch forward."""
    emb = table[tokens]                              # (B, L, E) -> Conv1d input
    out = jax.lax.conv_general_dilated(
        emb, w, window_strides=(1,), padding="VALID",
        dimension_numbers=("NCH", "OIH", "NCH"))
    out = out + bias[None, :, None]
    B, F, T = out.shape
    P = T // KP
    pooled = out[:, :, :P * KP].reshape(B, F, P, KP).max(-1)
    return pooled.reshape(B, F * P)


if __name__ == "__main__":
    # Module defaults: vocab_size=100, filters=32, kernel_size=(4,), embedding_size=128
    B, L = 2, 8
    V, E = 100, 128
    F, K, KP = 32, 4, 4                              # out_channels, conv k, pool k

    key = jax.random.PRNGKey(0)
    k1, k2, k3, k4 = jax.random.split(key, 4)
    tokens = jax.random.randint(k1, (B, L), 0, V, dtype=jnp.int32)
    table = jax.random.normal(k2, (V, E), jnp.float32)           # embedding weight
    w = jax.random.normal(k3, (F, L, K), jnp.float32) * 0.1      # Conv1d weight (O, I=L, K)
    bias = jax.random.normal(k4, (F,), jnp.float32) * 0.1        # Conv1d bias

    ref = ref_encoder(tokens, table, w, bias, KP)

    # Exercise BOTH grid configurations (single-step BB=2 path used on
    # v5e/v6e, and the 2-step BB=1 path used on multi-TC chips); the default
    # make_encoder(..., num_tensorcores=None) auto-detects one of these.
    for forced_cores in (1, 2):
        prepare, encoder = make_encoder(B, L, V, E, F, K, KP,
                                        num_tensorcores=forced_cores)
        params = prepare(table, w, bias)
        out = jax.block_until_ready(encoder(tokens, *params))
        np.testing.assert_allclose(np.asarray(out), np.asarray(ref),
                                   rtol=1e-5, atol=1e-5)
        assert out.shape == (B, F * ((E - K + 1) // KP))         # (2, 992)

    print("KERNEL_OK")
</pallas_src>

<mosaic_0001>
module attributes {stable_mosaic.version = 11 : i64} {
  func.func @kernel(%arg0: i32, %arg1: memref<2x8x1xi32, #tpu.memory_space<vmem>>, %arg2: memref<100x128xf32, #tpu.memory_space<vmem>>, %arg3: memref<32x32xf32, #tpu.memory_space<vmem>>, %arg4: memref<32x1xf32, #tpu.memory_space<vmem>>, %arg5: memref<256x62xf32, #tpu.memory_space<vmem>>, %arg6: memref<1x32x62xf32, #tpu.memory_space<vmem>>) attributes {dimension_semantics = [#tpu.dimension_semantics<parallel>], iteration_bounds = array<i64: 1>, scalar_prefetch = 0 : i64, scratch_operands = 0 : i64, tpu.core_type = #tpu.core_type<tc>, window_params = [{transform_indices = @transform_0, window_bounds = array<i64: 2, 8, 1>}, {pipeline_mode = #tpu.pipeline_mode<synchronous>, transform_indices = @transform_1, window_bounds = array<i64: 100, 128>}, {pipeline_mode = #tpu.pipeline_mode<synchronous>, transform_indices = @transform_2, window_bounds = array<i64: 32, 32>}, {pipeline_mode = #tpu.pipeline_mode<synchronous>, transform_indices = @transform_3, window_bounds = array<i64: 32, 1>}, {pipeline_mode = #tpu.pipeline_mode<synchronous>, transform_indices = @transform_4, window_bounds = array<i64: 256, 62>}, {transform_indices = @transform_5, window_bounds = array<i64: 1, 32, 62>}]} {
    %c0 = arith.constant 0 : index
    %c0_0 = arith.constant 0 : index
    %c0_1 = arith.constant 0 : index
    %0 = vector.load %arg1[%c0, %c0_0, %c0_1] : memref<2x8x1xi32, #tpu.memory_space<vmem>>, vector<2x8x1xi32>
    %1 = vector.shape_cast %0 : vector<2x8x1xi32> to vector<16x1xi32>
    %2 = tpu.iota {dimensions = array<i32: 1>} : vector<16x100xi32>
    %3 = vector.broadcast %1 : vector<16x1xi32> to vector<16x100xi32>
    %4 = arith.cmpi eq, %2, %3 : vector<16x100xi32>
    %5 = arith.extui %4 : vector<16x100xi1> to vector<16x100xi32>
    %6 = arith.sitofp %5 : vector<16x100xi32> to vector<16x100xf32>
    %c0_2 = arith.constant 0 : index
    %c0_3 = arith.constant 0 : index
    %7 = vector.load %arg2[%c0_2, %c0_3] : memref<100x128xf32, #tpu.memory_space<vmem>>, vector<100x128xf32>
    %cst = arith.constant dense<0.000000e+00> : vector<16x128xf32>
    %8 = tpu.matmul %6, %7, %cst {dimension_numbers = #tpu.dot_dimension_numbers<[1], [0], [0], [1], [0, 0, 1, 1], [], []>} : vector<16x100xf32>, vector<100x128xf32>, vector<16x128xf32> -> vector<16x128xf32>
    %c127_i32 = arith.constant 127 : i32
    %9 = tpu.dynamic_rotate %8 by %c127_i32 dim 1 : vector<16x128xf32>, i32 -> vector<16x128xf32>
    %c126_i32 = arith.constant 126 : i32
    %10 = tpu.dynamic_rotate %8 by %c126_i32 dim 1 : vector<16x128xf32>, i32 -> vector<16x128xf32>
    %c125_i32 = arith.constant 125 : i32
    %11 = tpu.dynamic_rotate %8 by %c125_i32 dim 1 : vector<16x128xf32>, i32 -> vector<16x128xf32>
    %12 = vector.extract_strided_slice %8 {offsets = [0, 0], sizes = [8, 128], strides = [1, 1]} : vector<16x128xf32> to vector<8x128xf32>
    %13 = vector.extract_strided_slice %9 {offsets = [0, 0], sizes = [8, 128], strides = [1, 1]} : vector<16x128xf32> to vector<8x128xf32>
    %14 = vector.extract_strided_slice %10 {offsets = [0, 0], sizes = [8, 128], strides = [1, 1]} : vector<16x128xf32> to vector<8x128xf32>
    %15 = vector.extract_strided_slice %11 {offsets = [0, 0], sizes = [8, 128], strides = [1, 1]} : vector<16x128xf32> to vector<8x128xf32>
    %16 = tpu.concatenate %12, %13, %14, %15 in 0 : vector<8x128xf32>, vector<8x128xf32>, vector<8x128xf32>, vector<8x128xf32> -> vector<32x128xf32>
    %17 = vector.extract_strided_slice %8 {offsets = [8, 0], sizes = [8, 128], strides = [1, 1]} : vector<16x128xf32> to vector<8x128xf32>
    %18 = vector.extract_strided_slice %9 {offsets = [8, 0], sizes = [8, 128], strides = [1, 1]} : vector<16x128xf32> to vector<8x128xf32>
    %19 = vector.extract_strided_slice %10 {offsets = [8, 0], sizes = [8, 128], strides = [1, 1]} : vector<16x128xf32> to vector<8x128xf32>
    %20 = vector.extract_strided_slice %11 {offsets = [8, 0], sizes = [8, 128], strides = [1, 1]} : vector<16x128xf32> to vector<8x128xf32>
    %21 = tpu.concatenate %17, %18, %19, %20 in 0 : vector<8x128xf32>, vector<8x128xf32>, vector<8x128xf32>, vector<8x128xf32> -> vector<32x128xf32>
    %22 = tpu.concatenate %16, %21 in 1 : vector<32x128xf32>, vector<32x128xf32> -> vector<32x256xf32>
    %c0_4 = arith.constant 0 : index
    %c0_5 = arith.constant 0 : index
    %23 = vector.load %arg3[%c0_4, %c0_5] : memref<32x32xf32, #tpu.memory_space<vmem>>, vector<32x32xf32>
    %cst_6 = arith.constant dense<0.000000e+00> : vector<32x256xf32>
    %24 = tpu.matmul %23, %22, %cst_6 {dimension_numbers = #tpu.dot_dimension_numbers<[1], [0], [0], [1], [0, 0, 1, 1], [], []>} : vector<32x32xf32>, vector<32x256xf32>, vector<32x256xf32> -> vector<32x256xf32>
    %c255_i32 = arith.constant 255 : i32
    %25 = tpu.dynamic_rotate %24 by %c255_i32 dim 1 : vector<32x256xf32>, i32 -> vector<32x256xf32>
    %26 = arith.maximumf %24, %25 : vector<32x256xf32>
    %c254_i32 = arith.constant 254 : i32
    %27 = tpu.dynamic_rotate %24 by %c254_i32 dim 1 : vector<32x256xf32>, i32 -> vector<32x256xf32>
    %28 = arith.maximumf %26, %27 : vector<32x256xf32>
    %c253_i32 = arith.constant 253 : i32
    %29 = tpu.dynamic_rotate %24 by %c253_i32 dim 1 : vector<32x256xf32>, i32 -> vector<32x256xf32>
    %30 = arith.maximumf %28, %29 : vector<32x256xf32>
    %c0_7 = arith.constant 0 : index
    %c0_8 = arith.constant 0 : index
    %31 = vector.load %arg5[%c0_7, %c0_8] : memref<256x62xf32, #tpu.memory_space<vmem>>, vector<256x62xf32>
    %cst_9 = arith.constant dense<0.000000e+00> : vector<32x62xf32>
    %32 = tpu.matmul %30, %31, %cst_9 {dimension_numbers = #tpu.dot_dimension_numbers<[1], [0], [0], [1], [0, 0, 1, 1], [], []>} : vector<32x256xf32>, vector<256x62xf32>, vector<32x62xf32> -> vector<32x62xf32>
    %c0_10 = arith.constant 0 : index
    %c0_11 = arith.constant 0 : index
    %33 = vector.load %arg4[%c0_10, %c0_11] : memref<32x1xf32, #tpu.memory_space<vmem>>, vector<32x1xf32>
    %34 = vector.broadcast %33 : vector<32x1xf32> to vector<32x62xf32>
    %35 = arith.addf %32, %34 : vector<32x62xf32>
    %c0_12 = arith.constant 0 : index
    %c0_13 = arith.constant 0 : index
    %c0_14 = arith.constant 0 : index
    %36 = vector.load %arg6[%c0_12, %c0_13, %c0_14] : memref<1x32x62xf32, #tpu.memory_space<vmem>>, vector<1x32x62xf32>
    %37 = vector.shape_cast %36 : vector<1x32x62xf32> to vector<32x62xf32>
    %38 = vector.shape_cast %35 : vector<32x62xf32> to vector<1x32x62xf32>
    tpu.vector_store %arg6[%c0_12, %c0_13, %c0_14], %38 {strides = array<i32>} : memref<1x32x62xf32, #tpu.memory_space<vmem>>, vector<1x32x62xf32>,
    return
  }
  func.func @transform_0(%arg0: i32) -> (i32, i32, i32) {
    %c0_i32 = arith.constant 0 : i32
    %c0_i32_0 = arith.constant 0 : i32
    %c0_i32_1 = arith.constant 0 : i32
    return %arg0, %c0_i32, %c0_i32_0 : i32, i32, i32
  }
  func.func @transform_1(%arg0: i32) -> (i32, i32) {
    %c0_i32 = arith.constant 0 : i32
    %c0_i32_0 = arith.constant 0 : i32
    %c0_i32_1 = arith.constant 0 : i32
    return %c0_i32, %c0_i32_0 : i32, i32
  }
  func.func @transform_2(%arg0: i32) -> (i32, i32) {
    %c0_i32 = arith.constant 0 : i32
    %c0_i32_0 = arith.constant 0 : i32
    %c0_i32_1 = arith.constant 0 : i32
    return %c0_i32, %c0_i32_0 : i32, i32
  }
  func.func @transform_3(%arg0: i32) -> (i32, i32) {
    %c0_i32 = arith.constant 0 : i32
    %c0_i32_0 = arith.constant 0 : i32
    %c0_i32_1 = arith.constant 0 : i32
    return %c0_i32, %c0_i32_0 : i32, i32
  }
  func.func @transform_4(%arg0: i32) -> (i32, i32) {
    %c0_i32 = arith.constant 0 : i32
    %c0_i32_0 = arith.constant 0 : i32
    %c0_i32_1 = arith.constant 0 : i32
    return %c0_i32, %c0_i32_0 : i32, i32
  }
  func.func @transform_5(%arg0: i32) -> (i32, i32, i32) {
    %c0_i32 = arith.constant 0 : i32
    %c0_i32_0 = arith.constant 0 : i32
    %c0_i32_1 = arith.constant 0 : i32
    return %arg0, %c0_i32, %c0_i32_0 : i32, i32, i32
  }
}

</mosaic_0001>

<llo_original>
// kernel: encoder.1
$region0: #{encoder.1}
  #allocation0 [shape = 'u32[]', space=smem, size = 0x4, offset = 0x4, fixed_abs, tag = 'smem constant byte address 0x4 - core index']
  #allocation1 [shape = 'u32[72,128]{1,0:T(1,128)}', space=vmem, size = 0x9000, scoped, tag = 'internal scratch']
  %s0 = inlined_call_operand.vmem [shape: s32[2,8,1], index: 0, kind: input, shape index: {}]
  %s1 = inlined_call_operand.hbm [shape: f32[100,128], index: 1, kind: input, shape index: {}]
  %s2 = inlined_call_operand.vmem [shape: f32[32,32], index: 2, kind: input, shape index: {}]
  %s3 = inlined_call_operand.vmem [shape: f32[32,1], index: 3, kind: input, shape index: {}]
  %s4 = inlined_call_operand.hbm [shape: f32[256,62], index: 4, kind: input, shape index: {}]
  %s5 = inlined_call_operand.vmem [shape: f32[1,32,62], index: 5, kind: output, shape index: {}]
  %s6 = sld [smem:[#allocation0]]
  $region38: #{encoder.1} parent=0
    _
  %s8 = ssub.s32 1, %s6
  %s9 = scalar_select 0, %s8, %s6
  $region1: #{encoder.1} parent=0
    #allocation2 [shape = 'u8[53248]{0}', space=vmem, size = 0xd000, scoped, tag = 'input window, operand 1, single buffered']
    #allocation3 [shape = 's32[1]{0}', space=sflag, size = 0x4, scoped, tag = 'scoped memory for encoder.1']
    #allocation4 [shape = 'u8[131072]{0}', space=vmem, size = 0x20000, scoped, tag = 'input window, operand 4, single buffered']
    #allocation5 [shape = 's32[1]{0}', space=sflag, size = 0x4, scoped, tag = 'scoped memory for encoder.1']
    %10 = vsyncpa [#allocation3], 0
    %11 = vsyncpa [#allocation5], 0
    // Predicated region
    $region2: #{encoder.1} parent=1 // pred_check
      _
    $region3: #{encoder.1} parent=1 // pred_check_branch
      %13 = sbr.rel (0) target = $region5
    $region4: #{encoder.1} parent=1 // pred_region
      _
    $region5: #{encoder.1} parent=1 // pred_fallthru
      _
    // Predicated region
    $region6: #{encoder.1} parent=1 // pred_check
      _
    $region7: #{encoder.1} parent=1 // pred_check_branch
      %15 = sbr.rel (0) target = $region9
    $region8: #{encoder.1} parent=1 // pred_region
      %17 = vsyncadd [#allocation3], 0
      %s18 = sshll.u32 %s1, 4
      %s19 = int_to_ptr.hbm [resolvable:$true] %s18
      %s20 = sshll.u32 [#allocation2], 4
      %s21 = int_to_ptr.vmem [resolvable:$true] %s20
      %26 = dma.hbm_to_vmem [thread:$0]  %s19, 1664, %s21, [#allocation3], 128, 128, 8
    $region9: #{encoder.1} parent=1 // pred_fallthru
      _
    // Predicated region
    $region10: #{encoder.1} parent=1 // pred_check
      _
    $region11: #{encoder.1} parent=1 // pred_check_branch
      %28 = sbr.rel (0) target = $region13
    $region12: #{encoder.1} parent=1 // pred_region
      _
    $region13: #{encoder.1} parent=1 // pred_fallthru
      _
    // Predicated region
    $region14: #{encoder.1} parent=1 // pred_check
      _
    $region15: #{encoder.1} parent=1 // pred_check_branch
      %30 = sbr.rel (0) target = $region17
    $region16: #{encoder.1} parent=1 // pred_region
      _
    $region17: #{encoder.1} parent=1 // pred_fallthru
      _
    // Predicated region
    $region18: #{encoder.1} parent=1 // pred_check
      _
    $region19: #{encoder.1} parent=1 // pred_check_branch
      %32 = sbr.rel (0) target = $region21
    $region20: #{encoder.1} parent=1 // pred_region
      %34 = vsyncadd [#allocation5], 0
      %s35 = sshll.u32 %s4, 4
      %s36 = int_to_ptr.hbm [resolvable:$true] %s35
      %s37 = sshll.u32 [#allocation4], 4
      %s38 = int_to_ptr.vmem [resolvable:$true] %s37
      %43 = dma.hbm_to_vmem [thread:$0]  %s36, 4096, %s38, [#allocation5], 128, 128, 8
    $region21: #{encoder.1} parent=1 // pred_fallthru
      _
    // Predicated region
    $region22: #{encoder.1} parent=1 // pred_check
      _
    $region23: #{encoder.1} parent=1 // pred_check_branch
      %45 = sbr.rel (0) target = $region25
    $region24: #{encoder.1} parent=1 // pred_region
      %47 = dma.done [#allocation3], 1664
    $region25: #{encoder.1} parent=1 // pred_fallthru
      _
    // Predicated region
    $region26: #{encoder.1} parent=1 // pred_check
      _
    $region27: #{encoder.1} parent=1 // pred_check_branch
      %49 = sbr.rel (0) target = $region29
    $region28: #{encoder.1} parent=1 // pred_region
      %51 = dma.done [#allocation5], 4096
    $region29: #{encoder.1} parent=1 // pred_fallthru
      _
    %v52 = vld [vmem:[%s0] sm:$0xff]
    %v53 = vld [vmem:[%s0 + $0x8] sm:$0xff]
    %v54 = vlaneseq
    %v55 = vand.u32 %v54, 127
    %56 = vset.pattern.permute.xlu0 0
    %57 = vperm.xlu0 %56, %v52
    %v58 = vpop.permute.xlu0 %57
    %59 = vset.pattern.permute.xlu0 0
    %60 = vperm.xlu0 %59, %v53
    %v61 = vpop.permute.xlu0 %60
    %vm62 = vcmp.eq.s32.totalorder %v55, %v58
    %vm63 = vcmp.eq.s32.totalorder %v55, %v61
    %v64 = vsel %vm62, 1, 0
    %v65 = vsel %vm63, 1, 0
    %v66 = vcvt.s32.f32 %v64
    %v67 = vcvt.s32.f32 %v65
    %v68 = vld [vmem:[#allocation2] sm:$0xff]
    %v69 = vld [vmem:[#allocation2 + $0x8] sm:$0xff]
    %v70 = vld [vmem:[#allocation2 + $0x10] sm:$0xff]
    %v71 = vld [vmem:[#allocation2 + $0x18] sm:$0xff]
    %v72 = vld [vmem:[#allocation2 + $0x20] sm:$0xff]
    %v73 = vld [vmem:[#allocation2 + $0x28] sm:$0xff]
    %v74 = vld [vmem:[#allocation2 + $0x30] sm:$0xff]
    %v75 = vld [vmem:[#allocation2 + $0x38] sm:$0xff]
    %v76 = vld [vmem:[#allocation2 + $0x40] sm:$0xff]
    %v77 = vld [vmem:[#allocation2 + $0x48] sm:$0xff]
    %v78 = vld [vmem:[#allocation2 + $0x50] sm:$0xff]
    %v79 = vld [vmem:[#allocation2 + $0x58] sm:$0xff]
    %v80 = vld [vmem:[#allocation2 + $0x60] sm:$0xf]
    %vm81 = vcmask 818176
    %v83 = vsel %vm81, %v66, 0
    %v86 = vsel %vm81, %v67, 0
    %vm88 = vcmask 1043456
    %v90 = vsel %vm88, %v80, 0
    %92 = vmatpush.msra.mxu0 0.0
    %93 = vmatpush.msra.mxu0 0.0
    %94 = vmatpush.msra.mxu0 0.0
    %95 = vmatpush.msra.mxu0 %v90
    %96 = vmatpush.msra.mxu0 %v79
    %97 = vmatpush.msra.mxu0 %v78
    %98 = vmatpush.msra.mxu0 %v77
    %99 = vmatpush.msra.mxu0 %v76
    %100 = vmatpush.msra.mxu0 %v75
    %101 = vmatpush.msra.mxu0 %v74
    %102 = vmatpush.msra.mxu0 %v73
    %103 = vmatpush.msra.mxu0 %v72
    %104 = vmatpush.msra.mxu0 %v71
    %105 = vmatpush.msra.mxu0 %v70
    %106 = vmatpush.msra.mxu0 %v69
    %107 = vmatpush.msra.mxu0 %v68
    %108 = vmatmul.f32.gmra.mxu0 %v83
    %v109 = vpop.f32.mrf.mxu0
    %v110 = vadd.f32 0.0, %v109
    %111 = vmatmul.f32.gmra.mxu0 %v86
    %v112 = vpop.f32.mrf.mxu0
    %v113 = vadd.f32 0.0, %v112
    %114 = vdwg.mxu0
    %115 = vrot.lane.b32.xlu0 %v110, 127
    %v116 = vpop.permute.xlu0 %115
    %117 = vrot.lane.b32.xlu0 %v113, 127
    %v118 = vpop.permute.xlu0 %117
    %119 = vrot.lane.b32.xlu0 %v110, 126
    %v120 = vpop.permute.xlu0 %119
    %121 = vrot.lane.b32.xlu0 %v113, 126
    %v122 = vpop.permute.xlu0 %121
    %123 = vrot.lane.b32.xlu0 %v110, 125
    %v124 = vpop.permute.xlu0 %123
    %125 = vrot.lane.b32.xlu0 %v113, 125
    %v126 = vpop.permute.xlu0 %125
    %v127 = vld [vmem:[%s2] sm:$0xff]
    %v128 = vld [vmem:[%s2 + $0x8] sm:$0xff]
    %v129 = vld [vmem:[%s2 + $0x10] sm:$0xff]
    %v130 = vld [vmem:[%s2 + $0x18] sm:$0xff]
    %vm131 = vcmask 261120
    %v133 = vsel %vm131, %v127, 0
    %v136 = vsel %vm131, %v128, 0
    %v139 = vsel %vm131, %v129, 0
    %v142 = vsel %vm131, %v130, 0
    %144 = vmatpush.msra.mxu0 0.0
    %145 = vmatpush.msra.mxu0 0.0
    %146 = vmatpush.msra.mxu0 0.0
    %147 = vmatpush.msra.mxu0 0.0
    %148 = vmatpush.msra.mxu0 0.0
    %149 = vmatpush.msra.mxu0 0.0
    %150 = vmatpush.msra.mxu0 0.0
    %151 = vmatpush.msra.mxu0 0.0
    %152 = vmatpush.msra.mxu0 0.0
    %153 = vmatpush.msra.mxu0 0.0
    %154 = vmatpush.msra.mxu0 0.0
    %155 = vmatpush.msra.mxu0 0.0
    %156 = vmatpush.msra.mxu0 %v124
    %157 = vmatpush.msra.mxu0 %v120
    %158 = vmatpush.msra.mxu0 %v116
    %159 = vmatpush.msra.mxu0 %v110
    %160 = vmatmul.f32.gmra.mxu0 %v133
    %v161 = vpop.f32.mrf.mxu0
    %v162 = vadd.f32 0.0, %v161
    %163 = vmatmul.f32.gmra.mxu0 %v136
    %v164 = vpop.f32.mrf.mxu0
    %v165 = vadd.f32 0.0, %v164
    %166 = vmatmul.f32.gmra.mxu0 %v139
    %v167 = vpop.f32.mrf.mxu0
    %v168 = vadd.f32 0.0, %v167
    %169 = vmatmul.f32.gmra.mxu0 %v142
    %v170 = vpop.f32.mrf.mxu0
    %v171 = vadd.f32 0.0, %v170
    %172 = vdwg.mxu0
    %173 = vmatpush.msra.mxu0 0.0
    %174 = vmatpush.msra.mxu0 0.0
    %175 = vmatpush.msra.mxu0 0.0
    %176 = vmatpush.msra.mxu0 0.0
    %177 = vmatpush.msra.mxu0 0.0
    %178 = vmatpush.msra.mxu0 0.0
    %179 = vmatpush.msra.mxu0 0.0
    %180 = vmatpush.msra.mxu0 0.0
    %181 = vmatpush.msra.mxu0 0.0
    %182 = vmatpush.msra.mxu0 0.0
    %183 = vmatpush.msra.mxu0 0.0
    %184 = vmatpush.msra.mxu0 0.0
    %185 = vmatpush.msra.mxu0 %v126
    %186 = vmatpush.msra.mxu0 %v122
    %187 = vmatpush.msra.mxu0 %v118
    %188 = vmatpush.msra.mxu0 %v113
    %189 = vmatmul.f32.gmra.mxu0 %v133
    %v190 = vpop.f32.mrf.mxu0
    %v191 = vadd.f32 0.0, %v190
    %192 = vmatmul.f32.gmra.mxu0 %v136
    %v193 = vpop.f32.mrf.mxu0
    %v194 = vadd.f32 0.0, %v193
    %195 = vmatmul.f32.gmra.mxu0 %v139
    %v196 = vpop.f32.mrf.mxu0
    %v197 = vadd.f32 0.0, %v196
    %198 = vmatmul.f32.gmra.mxu0 %v142
    %v199 = vpop.f32.mrf.mxu0
    %v200 = vadd.f32 0.0, %v199
    %201 = vdwg.mxu0
    %202 = vrot.lane.b32.xlu0 %v162, 127
    %v203 = vpop.permute.xlu0 %202
    %204 = vrot.lane.b32.xlu0 %v165, 127
    %v205 = vpop.permute.xlu0 %204
    %206 = vrot.lane.b32.xlu0 %v168, 127
    %v207 = vpop.permute.xlu0 %206
    %208 = vrot.lane.b32.xlu0 %v171, 127
    %v209 = vpop.permute.xlu0 %208
    %210 = vrot.lane.b32.xlu0 %v191, 127
    %v211 = vpop.permute.xlu0 %210
    %212 = vrot.lane.b32.xlu0 %v194, 127
    %v213 = vpop.permute.xlu0 %212
    %214 = vrot.lane.b32.xlu0 %v197, 127
    %v215 = vpop.permute.xlu0 %214
    %216 = vrot.lane.b32.xlu0 %v200, 127
    %v217 = vpop.permute.xlu0 %216
    %vm218 = vcmp.lt.s32.totalorder %v55, 127
    %v219 = vsel %vm218, %v203, %v211
    %v220 = vsel %vm218, %v205, %v213
    %v221 = vsel %vm218, %v207, %v215
    %v222 = vsel %vm218, %v209, %v217
    %v223 = vsel %vm218, %v211, %v203
    %v224 = vsel %vm218, %v213, %v205
    %v225 = vsel %vm218, %v215, %v207
    %v226 = vsel %vm218, %v217, %v209
    %v227 = vmax.f32 %v162, %v219
    %v228 = vmax.f32 %v191, %v223
    %v229 = vmax.f32 %v165, %v220
    %v230 = vmax.f32 %v194, %v224
    %v231 = vmax.f32 %v168, %v221
    %v232 = vmax.f32 %v197, %v225
    %v233 = vmax.f32 %v171, %v222
    %v234 = vmax.f32 %v200, %v226
    %235 = vrot.lane.b32.xlu0 %v162, 126
    %v236 = vpop.permute.xlu0 %235
    %237 = vrot.lane.b32.xlu0 %v165, 126
    %v238 = vpop.permute.xlu0 %237
    %239 = vrot.lane.b32.xlu0 %v168, 126
    %v240 = vpop.permute.xlu0 %239
    %241 = vrot.lane.b32.xlu0 %v171, 126
    %v242 = vpop.permute.xlu0 %241
    %243 = vrot.lane.b32.xlu0 %v191, 126
    %v244 = vpop.permute.xlu0 %243
    %245 = vrot.lane.b32.xlu0 %v194, 126
    %v246 = vpop.permute.xlu0 %245
    %247 = vrot.lane.b32.xlu0 %v197, 126
    %v248 = vpop.permute.xlu0 %247
    %249 = vrot.lane.b32.xlu0 %v200, 126
    %v250 = vpop.permute.xlu0 %249
    %vm251 = vcmp.lt.s32.totalorder %v55, 126
    %v252 = vsel %vm251, %v236, %v244
    %v253 = vsel %vm251, %v238, %v246
    %v254 = vsel %vm251, %v240, %v248
    %v255 = vsel %vm251, %v242, %v250
    %v256 = vsel %vm251, %v244, %v236
    %v257 = vsel %vm251, %v246, %v238
    %v258 = vsel %vm251, %v248, %v240
    %v259 = vsel %vm251, %v250, %v242
    %v260 = vmax.f32 %v227, %v252
    %v261 = vmax.f32 %v228, %v256
    %v262 = vmax.f32 %v229, %v253
    %v263 = vmax.f32 %v230, %v257
    %v264 = vmax.f32 %v231, %v254
    %v265 = vmax.f32 %v232, %v258
    %v266 = vmax.f32 %v233, %v255
    %v267 = vmax.f32 %v234, %v259
    %268 = vrot.lane.b32.xlu0 %v162, 125
    %v269 = vpop.permute.xlu0 %268
    %270 = vrot.lane.b32.xlu0 %v165, 125
    %v271 = vpop.permute.xlu0 %270
    %272 = vrot.lane.b32.xlu0 %v168, 125
    %v273 = vpop.permute.xlu0 %272
    %274 = vrot.lane.b32.xlu0 %v171, 125
    %v275 = vpop.permute.xlu0 %274
    %276 = vrot.lane.b32.xlu0 %v191, 125
    %v277 = vpop.permute.xlu0 %276
    %278 = vrot.lane.b32.xlu0 %v194, 125
    %v279 = vpop.permute.xlu0 %278
    %280 = vrot.lane.b32.xlu0 %v197, 125
    %v281 = vpop.permute.xlu0 %280
    %282 = vrot.lane.b32.xlu0 %v200, 125
    %v283 = vpop.permute.xlu0 %282
    %vm284 = vcmp.lt.s32.totalorder %v55, 125
    %v285 = vsel %vm284, %v269, %v277
    %v286 = vsel %vm284, %v271, %v279
    %v287 = vsel %vm284, %v273, %v281
    %v288 = vsel %vm284, %v275, %v283
    %v289 = vsel %vm284, %v277, %v269
    %v290 = vsel %vm284, %v279, %v271
    %v291 = vsel %vm284, %v281, %v273
    %v292 = vsel %vm284, %v283, %v275
    %v293 = vmax.f32 %v260, %v285
    %v294 = vmax.f32 %v261, %v289
    %v295 = vmax.f32 %v262, %v286
    %v296 = vmax.f32 %v263, %v290
    %v297 = vmax.f32 %v264, %v287
    %v298 = vmax.f32 %v265, %v291
    %v299 = vmax.f32 %v266, %v288
    %v300 = vmax.f32 %v267, %v292
    %v301 = vld [vmem:[#allocation4] sm:$0xff]
    %v302 = vld [vmem:[#allocation4 + $0x8] sm:$0xff]
    %v303 = vld [vmem:[#allocation4 + $0x10] sm:$0xff]
    %v304 = vld [vmem:[#allocation4 + $0x18] sm:$0xff]
    %v305 = vld [vmem:[#allocation4 + $0x20] sm:$0xff]
    %v306 = vld [vmem:[#allocation4 + $0x28] sm:$0xff]
    %v307 = vld [vmem:[#allocation4 + $0x30] sm:$0xff]
    %v308 = vld [vmem:[#allocation4 + $0x38] sm:$0xff]
    %v309 = vld [vmem:[#allocation4 + $0x40] sm:$0xff]
    %v310 = vld [vmem:[#allocation4 + $0x48] sm:$0xff]
    %v311 = vld [vmem:[#allocation4 + $0x50] sm:$0xff]
    %v312 = vld [vmem:[#allocation4 + $0x58] sm:$0xff]
    %v313 = vld [vmem:[#allocation4 + $0x60] sm:$0xff]
    %v314 = vld [vmem:[#allocation4 + $0x68] sm:$0xff]
    %v315 = vld [vmem:[#allocation4 + $0x70] sm:$0xff]
    %v316 = vld [vmem:[#allocation4 + $0x78] sm:$0xff]
    %v317 = vld [vmem:[#allocation4 + $0x80] sm:$0xff]
    %v318 = vld [vmem:[#allocation4 + $0x88] sm:$0xff]
    %v319 = vld [vmem:[#allocation4 + $0x90] sm:$0xff]
    %v320 = vld [vmem:[#allocation4 + $0x98] sm:$0xff]
    %v321 = vld [vmem:[#allocation4 + $0xa0] sm:$0xff]
    %v322 = vld [vmem:[#allocation4 + $0xa8] sm:$0xff]
    %v323 = vld [vmem:[#allocation4 + $0xb0] sm:$0xff]
    %v324 = vld [vmem:[#allocation4 + $0xb8] sm:$0xff]
    %v325 = vld [vmem:[#allocation4 + $0xc0] sm:$0xff]
    %v326 = vld [vmem:[#allocation4 + $0xc8] sm:$0xff]
    %v327 = vld [vmem:[#allocation4 + $0xd0] sm:$0xff]
    %v328 = vld [vmem:[#allocation4 + $0xd8] sm:$0xff]
    %v329 = vld [vmem:[#allocation4 + $0xe0] sm:$0xff]
    %v330 = vld [vmem:[#allocation4 + $0xe8] sm:$0xff]
    %v331 = vld [vmem:[#allocation4 + $0xf0] sm:$0xff]
    %v332 = vld [vmem:[#allocation4 + $0xf8] sm:$0xff]
    %v333 = vld [vmem:[%s3] sm:$0xff]
    %v334 = vld [vmem:[%s3 + $0x8] sm:$0xff]
    %v335 = vld [vmem:[%s3 + $0x10] sm:$0xff]
    %v336 = vld [vmem:[%s3 + $0x18] sm:$0xff]
    %338 = vset.pattern.permute.xlu0 0
    %339 = vperm.xlu0 %338, %v333
    %v340 = vpop.permute.xlu0 %339
    %343 = vset.pattern.permute.xlu0 0
    %344 = vperm.xlu0 %343, %v334
    %v345 = vpop.permute.xlu0 %344
    %348 = vset.pattern.permute.xlu0 0
    %349 = vperm.xlu0 %348, %v335
    %v350 = vpop.permute.xlu0 %349
    %353 = vset.pattern.permute.xlu0 0
    %354 = vperm.xlu0 %353, %v336
    %v355 = vpop.permute.xlu0 %354
    %357 = vmatpush.msra.mxu0 %v316
    %358 = vmatpush.msra.mxu0 %v315
    %359 = vmatpush.msra.mxu0 %v314
    %360 = vmatpush.msra.mxu0 %v313
    %361 = vmatpush.msra.mxu0 %v312
    %362 = vmatpush.msra.mxu0 %v311
    %363 = vmatpush.msra.mxu0 %v310
    %364 = vmatpush.msra.mxu0 %v309
    %365 = vmatpush.msra.mxu0 %v308
    %366 = vmatpush.msra.mxu0 %v307
    %367 = vmatpush.msra.mxu0 %v306
    %368 = vmatpush.msra.mxu0 %v305
    %369 = vmatpush.msra.mxu0 %v304
    %370 = vmatpush.msra.mxu0 %v303
    %371 = vmatpush.msra.mxu0 %v302
    %372 = vmatpush.msra.mxu0 %v301
    %373 = vmatmul.f32.gmra.mxu0 %v293
    %v374 = vpop.f32.mrf.mxu0
    %v375 = vadd.f32 %v340, %v374
    %376 = vmatmul.f32.gmra.mxu0 %v295
    %v377 = vpop.f32.mrf.mxu0
    %v378 = vadd.f32 %v345, %v377
    %379 = vmatmul.f32.gmra.mxu0 %v297
    %v380 = vpop.f32.mrf.mxu0
    %v381 = vadd.f32 %v350, %v380
    %382 = vmatmul.f32.gmra.mxu0 %v299
    %v383 = vpop.f32.mrf.mxu0
    %v384 = vadd.f32 %v355, %v383
    %385 = vdwg.mxu0
    %386 = vmatpush.msra.mxu0 %v332
    %387 = vmatpush.msra.mxu0 %v331
    %388 = vmatpush.msra.mxu0 %v330
    %389 = vmatpush.msra.mxu0 %v329
    %390 = vmatpush.msra.mxu0 %v328
    %391 = vmatpush.msra.mxu0 %v327
    %392 = vmatpush.msra.mxu0 %v326
    %393 = vmatpush.msra.mxu0 %v325
    %394 = vmatpush.msra.mxu0 %v324
    %395 = vmatpush.msra.mxu0 %v323
    %396 = vmatpush.msra.mxu0 %v322
    %397 = vmatpush.msra.mxu0 %v321
    %398 = vmatpush.msra.mxu0 %v320
    %399 = vmatpush.msra.mxu0 %v319
    %400 = vmatpush.msra.mxu0 %v318
    %401 = vmatpush.msra.mxu0 %v317
    %402 = vmatmul.f32.gmra.mxu0 %v294
    %v403 = vpop.f32.mrf.mxu0
    %v404 = vadd.f32 %v375, %v403
    %405 = vmatmul.f32.gmra.mxu0 %v296
    %v406 = vpop.f32.mrf.mxu0
    %v407 = vadd.f32 %v378, %v406
    %408 = vmatmul.f32.gmra.mxu0 %v298
    %v409 = vpop.f32.mrf.mxu0
    %v410 = vadd.f32 %v381, %v409
    %411 = vmatmul.f32.gmra.mxu0 %v300
    %v412 = vpop.f32.mrf.mxu0
    %v413 = vadd.f32 %v384, %v412
    %414 = vdwg.mxu0
    %vm415 = vcmask 506880
    %416 = vst.msk [vmem:[%s5] sm:$0xff] %vm415, %v404
    %417 = vst.msk [vmem:[%s5 + $0x8] sm:$0xff] %vm415, %v407
    %418 = vst.msk [vmem:[%s5 + $0x10] sm:$0xff] %vm415, %v410
    %419 = vst.msk [vmem:[%s5 + $0x18] sm:$0xff] %vm415, %v413
    // Predicated region
    $region30: #{encoder.1} parent=1 // pred_check
      _
    $region31: #{encoder.1} parent=1 // pred_check_branch
      %421 = sbr.rel (0) target = $region33
    $region32: #{encoder.1} parent=1 // pred_region
      _
    $region33: #{encoder.1} parent=1 // pred_fallthru
      _
    // Predicated region
    $region34: #{encoder.1} parent=1 // pred_check
      _
    $region35: #{encoder.1} parent=1 // pred_check_branch
      %423 = sbr.rel (0) target = $region37
    $region36: #{encoder.1} parent=1 // pred_region
      _
    $region37: #{encoder.1} parent=1 // pred_fallthru
      _
    %424 = vsyncpa [#allocation3], 1
    %425 = vsyncpa [#allocation5], 1

</llo_original>
